<compile_context>
chip_gen: v7x
topology: tpu7x:2x2x1
jax: 0.10.0
libtpu: 0.0.40
codegen_flags: <defaults>
</compile_context>

<pallas_src>
import jax
import jax.numpy as jnp
from jax.experimental import pallas as pl
from jax.experimental.pallas import tpu as pltpu

LANES = 128            # TPU vreg lane width
DEFAULT_TILE_M = 1024  # rows per grid step (multiple of 8 sublanes)


def _linreg_kernel(w_ref, b_ref, x_ref, o_ref):
    # w_ref / b_ref: (1,) scalars in SMEM.  x_ref / o_ref: (TILE_M, 128) VMEM
    # tiles.  Single fused elementwise expression on the VPU.
    o_ref[...] = w_ref[0] * x_ref[...] + b_ref[0]


def linear_regression_forward(x, weight, bias, *, tile_m=DEFAULT_TILE_M):
    """Pallas equivalent of LinearRegression.forward: weight * x + bias.

    x:      (N, 1) float32
    weight: (1,)   float32
    bias:   (1,)   float32
    returns (N, 1) float32
    """
    n, d = x.shape
    assert d == 1, "LinearRegression expects a column vector (N, 1)"

    x = x.astype(jnp.float32)
    w1d = weight.reshape(1).astype(jnp.float32)
    b1d = bias.reshape(1).astype(jnp.float32)

    # --- lane-dense repack: (N, 1) -> (rows_padded, 128) -------------------
    rows = -(-n // LANES)                                   # ceil(N / 128)
    # tile_m: multiple of 8 sublanes, no bigger than needed for small N
    tile_m = min(tile_m, max(8, ((rows + 7) // 8) * 8))
    rows_padded = -(-rows // tile_m) * tile_m               # multiple of tile_m
    padded_len = rows_padded * LANES

    flat = x.reshape(-1)
    if padded_len != n:
        flat = jnp.pad(flat, (0, padded_len - n))
    x2d = flat.reshape(rows_padded, LANES)

    grid = (rows_padded // tile_m,)

    out2d = pl.pallas_call(
        _linreg_kernel,
        out_shape=jax.ShapeDtypeStruct((rows_padded, LANES), jnp.float32),
        grid_spec=pltpu.PrefetchScalarGridSpec(
            num_scalar_prefetch=0,
            grid=grid,
            in_specs=[
                pl.BlockSpec(memory_space=pltpu.SMEM),            # weight (1,)
                pl.BlockSpec(memory_space=pltpu.SMEM),            # bias   (1,)
                pl.BlockSpec((tile_m, LANES), lambda i: (i, 0)),  # x tile
            ],
            out_specs=pl.BlockSpec((tile_m, LANES), lambda i: (i, 0)),
        ),
        compiler_params=pltpu.CompilerParams(
            dimension_semantics=("parallel",),
        ),
    )(w1d, b1d, x2d)

    # Drop padding and restore the (N, 1) column-vector shape.
    return out2d.reshape(-1)[:n].reshape(n, d)


if __name__ == "__main__":
    # Deterministic "randn" parameter init (matches shapes in __init__).
    key = jax.random.PRNGKey(0)
    kw, kb = jax.random.split(key)
    weight = jax.random.normal(kw, (1,), dtype=jnp.float32)
    bias = jax.random.normal(kb, (1,), dtype=jnp.float32)

    # Same input construction as the script: arange(0, 1, 0.001).unsqueeze(1)
    x = jnp.arange(0.0, 1.0, 0.001, dtype=jnp.float32).reshape(-1, 1)  # (1000, 1)

    y = linear_regression_forward(x, weight, bias)
    y = jax.block_until_ready(y)

    y_ref = weight * x + bias
    assert y.shape == x.shape
    assert jnp.allclose(y, y_ref, atol=1e-6), "mismatch vs reference (N=1000)"

    # Second check at a non-aligned, multi-tile size to exercise the gridded
    # path (grid > 1 tile) and the padding slice-off.
    n_big = 300_001
    x_big = jnp.linspace(-2.0, 2.0, n_big, dtype=jnp.float32).reshape(-1, 1)
    y_big = jax.block_until_ready(linear_regression_forward(x_big, weight, bias))
    y_big_ref = weight * x_big + bias
    assert y_big.shape == x_big.shape
    assert jnp.allclose(y_big, y_big_ref, atol=1e-5), "mismatch vs reference (N=300001)"

    print("KERNEL_OK")
</pallas_src>

<mosaic_0001>
module attributes {stable_mosaic.version = 11 : i64} {
  func.func @_linreg_kernel(%arg0: i32, %arg1: memref<1xf32, #tpu.memory_space<smem>>, %arg2: memref<1xf32, #tpu.memory_space<smem>>, %arg3: memref<8x128xf32, #tpu.memory_space<vmem>>, %arg4: memref<8x128xf32, #tpu.memory_space<vmem>>) attributes {dimension_semantics = [#tpu.dimension_semantics<parallel>], iteration_bounds = array<i64: 1>, scalar_prefetch = 0 : i64, scratch_operands = 0 : i64, tpu.core_type = #tpu.core_type<tc>, window_params = [{transform_indices = @transform_0, window_bounds = array<i64: 1>}, {transform_indices = @transform_1, window_bounds = array<i64: 1>}, {transform_indices = @transform_2, window_bounds = array<i64: 8, 128>}, {transform_indices = @transform_3, window_bounds = array<i64: 8, 128>}]} {
    %c0 = arith.constant 0 : index
    %0 = memref.load %arg1[%c0] : memref<1xf32, #tpu.memory_space<smem>>
    %c0_0 = arith.constant 0 : index
    %c0_1 = arith.constant 0 : index
    %1 = vector.load %arg3[%c0_0, %c0_1] : memref<8x128xf32, #tpu.memory_space<vmem>>, vector<8x128xf32>
    %2 = vector.broadcast %0 : f32 to vector<8x128xf32>
    %3 = arith.mulf %2, %1 : vector<8x128xf32>
    %c0_2 = arith.constant 0 : index
    %4 = memref.load %arg2[%c0_2] : memref<1xf32, #tpu.memory_space<smem>>
    %5 = vector.broadcast %4 : f32 to vector<8x128xf32>
    %6 = arith.addf %3, %5 : vector<8x128xf32>
    %c0_3 = arith.constant 0 : index
    %c0_4 = arith.constant 0 : index
    %7 = vector.load %arg4[%c0_3, %c0_4] : memref<8x128xf32, #tpu.memory_space<vmem>>, vector<8x128xf32>
    tpu.vector_store %arg4[%c0_3, %c0_4], %6 {strides = array<i32>} : memref<8x128xf32, #tpu.memory_space<vmem>>, vector<8x128xf32>,
    return
  }
  func.func @transform_0(%arg0: i32) -> i32 {
    %c0_i32 = arith.constant 0 : i32
    %c0_i32_0 = arith.constant 0 : i32
    return %c0_i32 : i32
  }
  func.func @transform_1(%arg0: i32) -> i32 {
    %c0_i32 = arith.constant 0 : i32
    %c0_i32_0 = arith.constant 0 : i32
    return %c0_i32 : i32
  }
  func.func @transform_2(%arg0: i32) -> (i32, i32) {
    %c0_i32 = arith.constant 0 : i32
    %c0_i32_0 = arith.constant 0 : i32
    return %arg0, %c0_i32 : i32, i32
  }
  func.func @transform_3(%arg0: i32) -> (i32, i32) {
    %c0_i32 = arith.constant 0 : i32
    %c0_i32_0 = arith.constant 0 : i32
    return %arg0, %c0_i32 : i32, i32
  }
}

</mosaic_0001>

<llo_original>
// kernel: tpu_custom_call.1
$region0: #{tpu_custom_call.1}
  #allocation0 [shape = 'u32[]', space=smem, size = 0x4, offset = 0x4, fixed_abs, tag = 'smem constant byte address 0x4 - core index']
  #allocation1 [shape = 'u32[144,128]{1,0:T(1,128)}', space=vmem, size = 0x12000, scoped, tag = 'internal scratch']
  #allocation2 [shape = 'f32[1]{0:T(128)S(6)}', space=smem, size = 0x200, scoped, tag = 'scoped memory for tpu_custom_call.1']
  #allocation3 [shape = 'f32[1]{0:T(128)S(6)}', space=smem, size = 0x200, scoped, tag = 'scoped memory for tpu_custom_call.1']
  %s0 = inlined_call_operand.<no memory space> [shape: f32[1], index: 0, kind: input, shape index: {}]
  %s1 = inlined_call_operand.<no memory space> [shape: f32[1], index: 1, kind: input, shape index: {}]
  %s2 = inlined_call_operand.hbm [shape: f32[8,128], index: 2, kind: input, shape index: {}]
  %s3 = inlined_call_operand.hbm [shape: f32[8,128], index: 3, kind: output, shape index: {}]
  %s4 = sld [smem:[#allocation0]]
  $region26: #{tpu_custom_call.1} parent=0
    _
  %s6 = ssub.s32 1, %s4
  %s7 = scalar_select 0, %s6, %s4
  %8 = sst [smem:[#allocation2]] %s0
  %9 = sst [smem:[#allocation3]] %s1
  $region1: #{tpu_custom_call.1} parent=0
    #allocation4 [shape = 'u8[4096]{0}', space=vmem, size = 0x1000, scoped, tag = 'input window, operand 2, single buffered']
    #allocation5 [shape = 's32[1]{0}', space=sflag, size = 0x4, scoped, tag = 'scoped memory for tpu_custom_call.1']
    #allocation6 [shape = 's32[1]{0}', space=sflag, size = 0x4, scoped, tag = 'scoped memory for tpu_custom_call.1']
    #allocation7 [shape = 'u8[4096]{0}', space=vmem, size = 0x1000, scoped, tag = 'output window, operand 0, single buffered']
    %10 = vsyncpa [#allocation5], 0
    %11 = vsyncpa [#allocation6], 0
    // Predicated region
    $region2: #{tpu_custom_call.1} parent=1 // pred_check
      _
    $region3: #{tpu_custom_call.1} parent=1 // pred_check_branch
      %13 = sbr.rel (0) target = $region5
    $region4: #{tpu_custom_call.1} parent=1 // pred_region
      _
    $region5: #{tpu_custom_call.1} parent=1 // pred_fallthru
      _
    // Predicated region
    $region6: #{tpu_custom_call.1} parent=1 // pred_check
      _
    $region7: #{tpu_custom_call.1} parent=1 // pred_check_branch
      %15 = sbr.rel (0) target = $region9
    $region8: #{tpu_custom_call.1} parent=1 // pred_region
      _
    $region9: #{tpu_custom_call.1} parent=1 // pred_fallthru
      _
    // Predicated region
    $region10: #{tpu_custom_call.1} parent=1 // pred_check
      _
    $region11: #{tpu_custom_call.1} parent=1 // pred_check_branch
      %17 = sbr.rel (0) target = $region13
    $region12: #{tpu_custom_call.1} parent=1 // pred_region
      %s19 = ssub.s32 128, 128
      %20 = vsyncadd [#allocation5], %s19
      %s22 = sshll.u32 [#allocation4], 4
      %s23 = int_to_ptr.vmem [resolvable:$true] %s22
      %25 = dma.hbm_to_vmem [thread:$0]  %s2, 128, %s23, [#allocation5]
    $region13: #{tpu_custom_call.1} parent=1 // pred_fallthru
      _
    // Predicated region
    $region14: #{tpu_custom_call.1} parent=1 // pred_check
      _
    $region15: #{tpu_custom_call.1} parent=1 // pred_check_branch
      %27 = sbr.rel (0) target = $region17
    $region16: #{tpu_custom_call.1} parent=1 // pred_region
      %28 = dma.done [#allocation5], 128
    $region17: #{tpu_custom_call.1} parent=1 // pred_fallthru
      _
    %s29 = sld [smem:[#allocation2]]
    %v30 = vld [vmem:[#allocation4] sm:$0xff]
    %v31 = vstv %s29
    %v32 = vmul.f32 %v31, %v30
    %s33 = sld [smem:[#allocation3]]
    %v34 = vstv %s33
    %v35 = vadd.f32 %v32, %v34
    %36 = vst [vmem:[#allocation7] sm:$0xff] %v35
    // Predicated region
    $region18: #{tpu_custom_call.1} parent=1 // pred_check
      _
    $region19: #{tpu_custom_call.1} parent=1 // pred_check_branch
      %38 = sbr.rel (0) target = $region21
    $region20: #{tpu_custom_call.1} parent=1 // pred_region
      %s40 = ssub.s32 128, 128
      %41 = vsyncadd [#allocation6], %s40
      %s43 = sshll.u32 [#allocation7], 4
      %s44 = int_to_ptr.vmem [resolvable:$true] %s43
      %46 = dma.vmem_to_hbm [thread:$0]  %s44, 128, %s3, [#allocation6]
    $region21: #{tpu_custom_call.1} parent=1 // pred_fallthru
      _
    // Predicated region
    $region22: #{tpu_custom_call.1} parent=1 // pred_check
      _
    $region23: #{tpu_custom_call.1} parent=1 // pred_check_branch
      %48 = sbr.rel (0) target = $region25
    $region24: #{tpu_custom_call.1} parent=1 // pred_region
      %49 = dma.done [#allocation6], 128
    $region25: #{tpu_custom_call.1} parent=1 // pred_fallthru
      _
    %50 = vsyncpa [#allocation5], 1
    %51 = vsyncpa [#allocation6], 1

</llo_original>
